<compile_context>
chip_gen: v6e
topology: v6e:2x2x1
jax: 0.10.0
libtpu: 0.0.40
codegen_flags: <defaults>
</compile_context>

<pallas_src>
import functools
import re

import jax
import jax.numpy as jnp
from jax.experimental import pallas as pl
from jax.experimental.pallas import tpu as pltpu

LANE = 128
TM_MAX = 2048      # default batch-tile cap (lanes); ~16 KB/tile of x -> VMEM is a non-issue


def _tpu_flags():
    """(bf16_acts, multi_tc) from the local TPU generation."""
    try:
        kind = jax.devices()[0].device_kind.lower()
    except Exception:
        kind = ""
    m = re.search(r"v(\d+)", kind)
    gen = int(m.group(1)) if m else 0
    bf16_acts = gen >= 6                                        # v6e/v7x: bf16 VPU/EUP
    multi_tc = gen >= 7 or gen == 4 or "v5p" in kind.replace(" ", "")
    return bf16_acts, multi_tc


_TPU_FLAGS = _tpu_flags()


def rawnet_kernel(xT_ref, w1_ref, b1_ref, w2_ref, b2_ref, w3_ref, b3_ref, o_ref,
                  *, bf16_acts):
    act_dt = jnp.bfloat16 if bf16_acts else jnp.float32

    xT = xT_ref[...]                                    # (2, tm)  batch on lanes
    w1 = w1_ref[...]                                    # (H, 2)

    # layer1: Linear(2, H) + tanh -- K=2 contraction as two VPU broadcast FMAs
    # (keeps the near-empty MXU push/pop off the critical path entirely).
    z1 = w1[:, 0:1] * xT[0:1, :] + w1[:, 1:2] * xT[1:2, :] + b1_ref[...]    # (H, tm) f32
    h1 = jnp.tanh(z1.astype(act_dt))                    # bf16 tanh on v6e/v7x, f32 on v5e

    # layer2: Linear(H, H) + tanh -- the only MXU matmul; bf16 operands (single
    # native MXU pass on every generation), f32 accumulation.
    z2 = jnp.dot(w2_ref[...].astype(jnp.bfloat16), h1.astype(jnp.bfloat16),
                 preferred_element_type=jnp.float32) + b2_ref[...]          # (H, tm) f32
    h2 = jnp.tanh(z2.astype(act_dt))

    # layer3: Linear(H, 1) + sigmoid -- elementwise mul + sublane reduction (XLU,
    # otherwise idle) instead of a 1-lane-wide MXU result; kept in f32.
    z3 = jnp.sum(w3_ref[...] * h2.astype(jnp.float32), axis=0, keepdims=True) + b3_ref[0]
    o_ref[...] = jax.nn.sigmoid(z3)                     # lane-dense (1, tm) store


def _choose_tile(B, multi_tc, tm_max):
    """Pick (tm, Bp): tm multiple of 128, >=2 grid blocks on multi-TC chips."""
    b_lanes = pl.cdiv(B, LANE) * LANE
    if multi_tc and b_lanes >= 2 * LANE:
        tm = min(tm_max, pl.cdiv(b_lanes // 2, LANE) * LANE)   # at least 2 blocks
    else:
        tm = min(tm_max, b_lanes)                               # one big block if it fits
    Bp = pl.cdiv(B, tm) * tm
    return tm, Bp


@functools.partial(jax.jit, static_argnames=("bf16_acts", "multi_tc", "tm_max"))
def _rawnet_fwd_xt(xT, w1, b1, w2, b2, w3, b3, *, bf16_acts, multi_tc, tm_max):
    """xT: (2, B) float32.  Returns (B,) float32 (sigmoid outputs)."""
    B = xT.shape[1]
    H = w1.shape[0]
    tm, Bp = _choose_tile(B, multi_tc, tm_max)
    if Bp != B:
        xT = jnp.pad(xT, ((0, 0), (0, Bp - B)))        # only for ragged B

    def resident(shape):                               # fetched once, stays in VMEM
        return pl.BlockSpec(shape, lambda i: (0, 0))

    out = pl.pallas_call(
        functools.partial(rawnet_kernel, bf16_acts=bf16_acts),
        out_shape=jax.ShapeDtypeStruct((1, Bp), jnp.float32),
        grid=(Bp // tm,),
        in_specs=[
            pl.BlockSpec((2, tm), lambda i: (0, i)),            # x^T batch tile
            resident((H, 2)),                                   # w1
            resident((H, 1)),                                   # b1
            resident((H, H)),                                   # w2
            resident((H, 1)),                                   # b2
            resident((H, 1)),                                   # w3 (stored as W3^T)
            pl.BlockSpec(memory_space=pltpu.MemorySpace.SMEM),  # b3 scalar
        ],
        out_specs=pl.BlockSpec((1, tm), lambda i: (0, i)),
        compiler_params=pltpu.CompilerParams(
            dimension_semantics=("parallel",),                  # shard batch grid over TCs
        ),
    )(xT, w1, b1, w2, b2, w3, b3)

    return out[0, :B]                                  # view when B == Bp


def rawnet_forward_xt(xT, params, *, tm_max=TM_MAX):
    """Fast path: x already in (2, B) layout; returns (B,)."""
    bf16_acts, multi_tc = _TPU_FLAGS
    w1, b1, w2, b2, w3, b3 = params
    return _rawnet_fwd_xt(xT, w1, b1, w2, b2, w3, b3,
                          bf16_acts=bf16_acts, multi_tc=multi_tc, tm_max=tm_max)


def rawnet_forward(x, params, *, tm_max=TM_MAX):
    """Module-compatible path: x (B, 2) -> (B, 1), matching torch RawNet.forward."""
    return rawnet_forward_xt(jnp.transpose(x), params, tm_max=tm_max)[:, None]


def init_params(key, num_hid):
    """Deterministic torch-style init; torch Linear layout (out, in) weights."""
    ks = jax.random.split(key, 6)

    def uniform(k, shape, fan_in):
        bound = 1.0 / jnp.sqrt(fan_in)
        return jax.random.uniform(k, shape, jnp.float32, -bound, bound)

    w1 = uniform(ks[0], (num_hid, 2), 2.0)
    b1 = uniform(ks[1], (num_hid, 1), 2.0)
    w2 = uniform(ks[2], (num_hid, num_hid), float(num_hid))
    b2 = uniform(ks[3], (num_hid, 1), float(num_hid))
    w3 = uniform(ks[4], (num_hid, 1), float(num_hid))   # torch W3 (1,H), stored transposed
    b3 = uniform(ks[5], (1,), float(num_hid))
    return (w1, b1, w2, b2, w3, b3)


def rawnet_reference(x, params):
    """Pure-JAX reference of RawNet.forward (torch Linear semantics), x: (B, 2)."""
    w1, b1, w2, b2, w3, b3 = params
    h1 = jnp.tanh(x[:, 0:1] * w1[:, 0] + x[:, 1:2] * w1[:, 1] + b1[:, 0])
    h2 = jnp.tanh(h1 @ w2.T + b2[:, 0])
    z = jnp.sum(h2 * w3[:, 0], axis=-1, keepdims=True) + b3[0]
    return jax.nn.sigmoid(z)


if __name__ == "__main__":
    num_hid = 32
    key = jax.random.PRNGKey(0)
    k_x, k_p = jax.random.split(key)
    params = init_params(k_p, num_hid)

    bf16_acts, _ = _TPU_FLAGS
    tol = 2e-2 if bf16_acts else 2e-3     # bf16 activations need a looser check

    # 1) Fast-path API: x already in (2, B) layout; B multiple of 128 (no padding).
    batch = 256
    xT = jax.random.normal(k_x, (2, batch), jnp.float32)
    y = jax.block_until_ready(rawnet_forward_xt(xT, params))
    ref = rawnet_reference(xT.T, params)[:, 0]
    assert y.shape == (batch,)
    assert jnp.allclose(y, ref, atol=tol, rtol=tol), float(jnp.max(jnp.abs(y - ref)))

    # 2) Module-compatible API with a ragged batch (exercises the pad path).
    batch2 = 100
    x2 = jax.random.normal(k_x, (batch2, 2), jnp.float32)
    y2 = jax.block_until_ready(rawnet_forward(x2, params))
    ref2 = rawnet_reference(x2, params)
    assert y2.shape == (batch2, 1)
    assert jnp.allclose(y2, ref2, atol=tol, rtol=tol), float(jnp.max(jnp.abs(y2 - ref2)))

    print("KERNEL_OK")
</pallas_src>

<mosaic_0001>
module attributes {stable_mosaic.version = 11 : i64} {
  func.func @rawnet_kernel(%arg0: i32, %arg1: memref<2x256xf32, #tpu.memory_space<vmem>>, %arg2: memref<32x2xf32, #tpu.memory_space<vmem>>, %arg3: memref<32x1xf32, #tpu.memory_space<vmem>>, %arg4: memref<32x32xf32, #tpu.memory_space<vmem>>, %arg5: memref<32x1xf32, #tpu.memory_space<vmem>>, %arg6: memref<32x1xf32, #tpu.memory_space<vmem>>, %arg7: memref<1xf32, #tpu.memory_space<smem>>, %arg8: memref<1x256xf32, #tpu.memory_space<vmem>>) attributes {dimension_semantics = [#tpu.dimension_semantics<parallel>], iteration_bounds = array<i64: 1>, scalar_prefetch = 0 : i64, scratch_operands = 0 : i64, tpu.core_type = #tpu.core_type<tc>, window_params = [{transform_indices = @transform_0, window_bounds = array<i64: 2, 256>}, {pipeline_mode = #tpu.pipeline_mode<synchronous>, transform_indices = @transform_1, window_bounds = array<i64: 32, 2>}, {pipeline_mode = #tpu.pipeline_mode<synchronous>, transform_indices = @transform_2, window_bounds = array<i64: 32, 1>}, {pipeline_mode = #tpu.pipeline_mode<synchronous>, transform_indices = @transform_3, window_bounds = array<i64: 32, 32>}, {pipeline_mode = #tpu.pipeline_mode<synchronous>, transform_indices = @transform_4, window_bounds = array<i64: 32, 1>}, {pipeline_mode = #tpu.pipeline_mode<synchronous>, transform_indices = @transform_5, window_bounds = array<i64: 32, 1>}, {transform_indices = @transform_6, window_bounds = array<i64: 1>}, {transform_indices = @transform_7, window_bounds = array<i64: 1, 256>}]} {
    %c0 = arith.constant 0 : index
    %c0_0 = arith.constant 0 : index
    %0 = vector.load %arg1[%c0, %c0_0] : memref<2x256xf32, #tpu.memory_space<vmem>>, vector<2x256xf32>
    %c0_1 = arith.constant 0 : index
    %c0_2 = arith.constant 0 : index
    %1 = vector.load %arg2[%c0_1, %c0_2] : memref<32x2xf32, #tpu.memory_space<vmem>>, vector<32x2xf32>
    %2 = vector.extract_strided_slice %1 {offsets = [0, 0], sizes = [32, 1], strides = [1, 1]} : vector<32x2xf32> to vector<32x1xf32>
    %3 = vector.extract_strided_slice %0 {offsets = [0, 0], sizes = [1, 256], strides = [1, 1]} : vector<2x256xf32> to vector<1x256xf32>
    %4 = vector.broadcast %2 : vector<32x1xf32> to vector<32x256xf32>
    %5 = vector.broadcast %3 : vector<1x256xf32> to vector<32x256xf32>
    %6 = arith.mulf %4, %5 : vector<32x256xf32>
    %7 = vector.extract_strided_slice %1 {offsets = [0, 1], sizes = [32, 1], strides = [1, 1]} : vector<32x2xf32> to vector<32x1xf32>
    %8 = vector.extract_strided_slice %0 {offsets = [1, 0], sizes = [1, 256], strides = [1, 1]} : vector<2x256xf32> to vector<1x256xf32>
    %9 = vector.broadcast %7 : vector<32x1xf32> to vector<32x256xf32>
    %10 = vector.broadcast %8 : vector<1x256xf32> to vector<32x256xf32>
    %11 = arith.mulf %9, %10 : vector<32x256xf32>
    %12 = arith.addf %6, %11 : vector<32x256xf32>
    %c0_3 = arith.constant 0 : index
    %c0_4 = arith.constant 0 : index
    %13 = vector.load %arg3[%c0_3, %c0_4] : memref<32x1xf32, #tpu.memory_space<vmem>>, vector<32x1xf32>
    %14 = vector.broadcast %13 : vector<32x1xf32> to vector<32x256xf32>
    %15 = arith.addf %12, %14 : vector<32x256xf32>
    %16 = math.tanh %15 : vector<32x256xf32>
    %c0_5 = arith.constant 0 : index
    %c0_6 = arith.constant 0 : index
    %17 = vector.load %arg4[%c0_5, %c0_6] : memref<32x32xf32, #tpu.memory_space<vmem>>, vector<32x32xf32>
    %18 = arith.truncf %17 : vector<32x32xf32> to vector<32x32xbf16>
    %19 = arith.truncf %16 : vector<32x256xf32> to vector<32x256xbf16>
    %cst = arith.constant dense<0.000000e+00> : vector<32x256xf32>
    %20 = tpu.matmul %18, %19, %cst {dimension_numbers = #tpu.dot_dimension_numbers<[1], [0], [0], [1], [0, 0, 1, 1], [], []>} : vector<32x32xbf16>, vector<32x256xbf16>, vector<32x256xf32> -> vector<32x256xf32>
    %c0_7 = arith.constant 0 : index
    %c0_8 = arith.constant 0 : index
    %21 = vector.load %arg5[%c0_7, %c0_8] : memref<32x1xf32, #tpu.memory_space<vmem>>, vector<32x1xf32>
    %22 = vector.broadcast %21 : vector<32x1xf32> to vector<32x256xf32>
    %23 = arith.addf %20, %22 : vector<32x256xf32>
    %24 = math.tanh %23 : vector<32x256xf32>
    %c0_9 = arith.constant 0 : index
    %c0_10 = arith.constant 0 : index
    %25 = vector.load %arg6[%c0_9, %c0_10] : memref<32x1xf32, #tpu.memory_space<vmem>>, vector<32x1xf32>
    %26 = vector.broadcast %25 : vector<32x1xf32> to vector<32x256xf32>
    %27 = arith.mulf %26, %24 : vector<32x256xf32>
    %cst_11 = arith.constant dense<0.000000e+00> : vector<256xf32>
    %28 = vector.multi_reduction <add>, %27, %cst_11 [0] : vector<32x256xf32> to vector<256xf32>
    %29 = vector.shape_cast %28 : vector<256xf32> to vector<1x256xf32>
    %c0_12 = arith.constant 0 : index
    %30 = memref.load %arg7[%c0_12] : memref<1xf32, #tpu.memory_space<smem>>
    %31 = vector.broadcast %30 : f32 to vector<1x256xf32>
    %32 = arith.addf %29, %31 : vector<1x256xf32>
    %33 = arith.negf %32 : vector<1x256xf32>
    %34 = math.exp %33 : vector<1x256xf32>
    %cst_13 = arith.constant 1.000000e+00 : f32
    %35 = vector.broadcast %cst_13 : f32 to vector<1x256xf32>
    %36 = arith.addf %35, %34 : vector<1x256xf32>
    %37 = arith.divf %35, %36 : vector<1x256xf32>
    %c0_14 = arith.constant 0 : index
    %c0_15 = arith.constant 0 : index
    %38 = vector.load %arg8[%c0_14, %c0_15] : memref<1x256xf32, #tpu.memory_space<vmem>>, vector<1x256xf32>
    tpu.vector_store %arg8[%c0_14, %c0_15], %37 {strides = array<i32>} : memref<1x256xf32, #tpu.memory_space<vmem>>, vector<1x256xf32>,
    return
  }
  func.func @transform_0(%arg0: i32) -> (i32, i32) {
    %c0_i32 = arith.constant 0 : i32
    %c0_i32_0 = arith.constant 0 : i32
    return %c0_i32, %arg0 : i32, i32
  }
  func.func @transform_1(%arg0: i32) -> (i32, i32) {
    %c0_i32 = arith.constant 0 : i32
    %c0_i32_0 = arith.constant 0 : i32
    %c0_i32_1 = arith.constant 0 : i32
    return %c0_i32, %c0_i32_0 : i32, i32
  }
  func.func @transform_2(%arg0: i32) -> (i32, i32) {
    %c0_i32 = arith.constant 0 : i32
    %c0_i32_0 = arith.constant 0 : i32
    %c0_i32_1 = arith.constant 0 : i32
    return %c0_i32, %c0_i32_0 : i32, i32
  }
  func.func @transform_3(%arg0: i32) -> (i32, i32) {
    %c0_i32 = arith.constant 0 : i32
    %c0_i32_0 = arith.constant 0 : i32
    %c0_i32_1 = arith.constant 0 : i32
    return %c0_i32, %c0_i32_0 : i32, i32
  }
  func.func @transform_4(%arg0: i32) -> (i32, i32) {
    %c0_i32 = arith.constant 0 : i32
    %c0_i32_0 = arith.constant 0 : i32
    %c0_i32_1 = arith.constant 0 : i32
    return %c0_i32, %c0_i32_0 : i32, i32
  }
  func.func @transform_5(%arg0: i32) -> (i32, i32) {
    %c0_i32 = arith.constant 0 : i32
    %c0_i32_0 = arith.constant 0 : i32
    %c0_i32_1 = arith.constant 0 : i32
    return %c0_i32, %c0_i32_0 : i32, i32
  }
  func.func @transform_6(%arg0: i32) -> i32 {
    %c0_i32 = arith.constant 0 : i32
    %c0_i32_0 = arith.constant 0 : i32
    return %c0_i32 : i32
  }
  func.func @transform_7(%arg0: i32) -> (i32, i32) {
    %c0_i32 = arith.constant 0 : i32
    %c0_i32_0 = arith.constant 0 : i32
    return %c0_i32, %arg0 : i32, i32
  }
}

</mosaic_0001>

<llo_original>
// kernel: _rawnet_fwd_xt.1
$region0: #{_rawnet_fwd_xt.1}
  #allocation0 [shape = 'u32[]', space=smem, size = 0x4, offset = 0x4, fixed_abs, tag = 'smem constant byte address 0x4 - core index']
  #allocation1 [shape = 'u32[144,128]{1,0:T(1,128)}', space=vmem, size = 0x12000, scoped, tag = 'internal scratch']
  #allocation2 [shape = 'f32[1]{0:T(128)S(6)}', space=smem, size = 0x200, scoped, tag = 'scoped memory for _rawnet_fwd_xt.1']
  %s0 = inlined_call_operand.vmem [shape: f32[2,256], index: 0, kind: input, shape index: {}]
  %s1 = inlined_call_operand.vmem [shape: f32[32,2], index: 1, kind: input, shape index: {}]
  %s2 = inlined_call_operand.vmem [shape: f32[32,1], index: 2, kind: input, shape index: {}]
  %s3 = inlined_call_operand.vmem [shape: f32[32,32], index: 3, kind: input, shape index: {}]
  %s4 = inlined_call_operand.vmem [shape: f32[32,1], index: 4, kind: input, shape index: {}]
  %s5 = inlined_call_operand.vmem [shape: f32[32,1], index: 5, kind: input, shape index: {}]
  %s6 = inlined_call_operand.<no memory space> [shape: f32[1], index: 6, kind: input, shape index: {}]
  %s7 = inlined_call_operand.hbm [shape: f32[1,256], index: 7, kind: output, shape index: {}]
  %s8 = sld [smem:[#allocation0]]
  $region38: #{_rawnet_fwd_xt.1} parent=0
    _
  %s10 = ssub.s32 1, %s8
  %s11 = scalar_select 0, %s10, %s8
  %12 = sst [smem:[#allocation2]] %s6
  $region1: #{_rawnet_fwd_xt.1} parent=0
    #allocation3 [shape = 'u8[1024]{0}', space=vmem, size = 0x400, scoped, tag = 'output window, operand 0, single buffered']
    #allocation4 [shape = 's32[1]{0}', space=sflag, size = 0x4, scoped, tag = 'scoped memory for _rawnet_fwd_xt.1']
    %13 = vsyncpa [#allocation4], 0
    // Predicated region
    $region2: #{_rawnet_fwd_xt.1} parent=1 // pred_check
      _
    $region3: #{_rawnet_fwd_xt.1} parent=1 // pred_check_branch
      %15 = sbr.rel (0) target = $region5
    $region4: #{_rawnet_fwd_xt.1} parent=1 // pred_region
      _
    $region5: #{_rawnet_fwd_xt.1} parent=1 // pred_fallthru
      _
    // Predicated region
    $region6: #{_rawnet_fwd_xt.1} parent=1 // pred_check
      _
    $region7: #{_rawnet_fwd_xt.1} parent=1 // pred_check_branch
      %17 = sbr.rel (0) target = $region9
    $region8: #{_rawnet_fwd_xt.1} parent=1 // pred_region
      _
    $region9: #{_rawnet_fwd_xt.1} parent=1 // pred_fallthru
      _
    // Predicated region
    $region10: #{_rawnet_fwd_xt.1} parent=1 // pred_check
      _
    $region11: #{_rawnet_fwd_xt.1} parent=1 // pred_check_branch
      %19 = sbr.rel (0) target = $region13
    $region12: #{_rawnet_fwd_xt.1} parent=1 // pred_region
      _
    $region13: #{_rawnet_fwd_xt.1} parent=1 // pred_fallthru
      _
    // Predicated region
    $region14: #{_rawnet_fwd_xt.1} parent=1 // pred_check
      _
    $region15: #{_rawnet_fwd_xt.1} parent=1 // pred_check_branch
      %21 = sbr.rel (0) target = $region17
    $region16: #{_rawnet_fwd_xt.1} parent=1 // pred_region
      _
    $region17: #{_rawnet_fwd_xt.1} parent=1 // pred_fallthru
      _
    // Predicated region
    $region18: #{_rawnet_fwd_xt.1} parent=1 // pred_check
      _
    $region19: #{_rawnet_fwd_xt.1} parent=1 // pred_check_branch
      %23 = sbr.rel (0) target = $region21
    $region20: #{_rawnet_fwd_xt.1} parent=1 // pred_region
      _
    $region21: #{_rawnet_fwd_xt.1} parent=1 // pred_fallthru
      _
    // Predicated region
    $region22: #{_rawnet_fwd_xt.1} parent=1 // pred_check
      _
    $region23: #{_rawnet_fwd_xt.1} parent=1 // pred_check_branch
      %25 = sbr.rel (0) target = $region25
    $region24: #{_rawnet_fwd_xt.1} parent=1 // pred_region
      _
    $region25: #{_rawnet_fwd_xt.1} parent=1 // pred_fallthru
      _
    // Predicated region
    $region26: #{_rawnet_fwd_xt.1} parent=1 // pred_check
      _
    $region27: #{_rawnet_fwd_xt.1} parent=1 // pred_check_branch
      %27 = sbr.rel (0) target = $region29
    $region28: #{_rawnet_fwd_xt.1} parent=1 // pred_region
      _
    $region29: #{_rawnet_fwd_xt.1} parent=1 // pred_fallthru
      _
    %v29 = vld [vmem:[%s0] sm:$0xf]
    %v30 = vld [vmem:[%s1] sm:$0xff]
    %v31 = vld [vmem:[%s1 + $0x8] sm:$0xff]
    %v32 = vld [vmem:[%s1 + $0x10] sm:$0xff]
    %v33 = vld [vmem:[%s1 + $0x18] sm:$0xff]
    %35 = vset.pattern.permute.xlu0 0
    %36 = vperm.xlu0 %35, %v30
    %v37 = vpop.permute.xlu0 %36
    %40 = vset.pattern.permute.xlu0 0
    %41 = vperm.xlu0 %40, %v31
    %v42 = vpop.permute.xlu0 %41
    %45 = vset.pattern.permute.xlu0 0
    %46 = vperm.xlu0 %45, %v32
    %v47 = vpop.permute.xlu0 %46
    %50 = vset.pattern.permute.xlu0 0
    %51 = vperm.xlu0 %50, %v33
    %v52 = vpop.permute.xlu0 %51
    %v55 = vlaneseq
    %v56 = vshrl.u32 %v55, 7
    %v57 = vsub.s32 0, %v56
    %v58 = vrot.slane %v29, %v57
    %v59 = vlaneseq
    %v60 = vshrl.u32 %v59, 7
    %v61 = vsub.s32 2, %v60
    %v62 = vrot.slane %v29, %v61
    %v65 = vlaneseq
    %v66 = vshrl.u32 %v65, 7
    %v67 = vsub.s32 0, %v66
    %v68 = vrot.slane %v58, %v67
    %v69 = vlaneseq
    %v70 = vshrl.u32 %v69, 7
    %v71 = vsub.s32 0, %v70
    %v72 = vrot.slane %v62, %v71
    %v73 = vmul.f32 %v37, %v68
    %v74 = vmul.f32 %v37, %v72
    %v75 = vmul.f32 %v42, %v68
    %v76 = vmul.f32 %v42, %v72
    %v77 = vmul.f32 %v47, %v68
    %v78 = vmul.f32 %v47, %v72
    %v79 = vmul.f32 %v52, %v68
    %v80 = vmul.f32 %v52, %v72
    %81 = vset.pattern.permute.xlu0 1
    %82 = vperm.xlu0 %81, %v30
    %v83 = vpop.permute.xlu0 %82
    %85 = vset.pattern.permute.xlu0 1
    %86 = vperm.xlu0 %85, %v31
    %v87 = vpop.permute.xlu0 %86
    %89 = vset.pattern.permute.xlu0 1
    %90 = vperm.xlu0 %89, %v32
    %v91 = vpop.permute.xlu0 %90
    %93 = vset.pattern.permute.xlu0 1
    %94 = vperm.xlu0 %93, %v33
    %v95 = vpop.permute.xlu0 %94
    %v97 = vlaneseq
    %v98 = vshrl.u32 %v97, 7
    %v99 = vsub.s32 1, %v98
    %v100 = vrot.slane %v29, %v99
    %v101 = vlaneseq
    %v102 = vshrl.u32 %v101, 7
    %v103 = vsub.s32 3, %v102
    %v104 = vrot.slane %v29, %v103
    %v107 = vlaneseq
    %v108 = vshrl.u32 %v107, 7
    %v109 = vsub.s32 1, %v108
    %v110 = vrot.slane %v100, %v109
    %v111 = vlaneseq
    %v112 = vshrl.u32 %v111, 7
    %v113 = vsub.s32 1, %v112
    %v114 = vrot.slane %v104, %v113
    %v115 = vmul.f32 %v83, %v110
    %v116 = vmul.f32 %v83, %v114
    %v117 = vmul.f32 %v87, %v110
    %v118 = vmul.f32 %v87, %v114
    %v119 = vmul.f32 %v91, %v110
    %v120 = vmul.f32 %v91, %v114
    %v121 = vmul.f32 %v95, %v110
    %v122 = vmul.f32 %v95, %v114
    %v123 = vadd.f32 %v73, %v115
    %v124 = vadd.f32 %v74, %v116
    %v125 = vadd.f32 %v75, %v117
    %v126 = vadd.f32 %v76, %v118
    %v127 = vadd.f32 %v77, %v119
    %v128 = vadd.f32 %v78, %v120
    %v129 = vadd.f32 %v79, %v121
    %v130 = vadd.f32 %v80, %v122
    %v131 = vld [vmem:[%s2] sm:$0xff]
    %v132 = vld [vmem:[%s2 + $0x8] sm:$0xff]
    %v133 = vld [vmem:[%s2 + $0x10] sm:$0xff]
    %v134 = vld [vmem:[%s2 + $0x18] sm:$0xff]
    %136 = vset.pattern.permute.xlu0 0
    %137 = vperm.xlu0 %136, %v131
    %v138 = vpop.permute.xlu0 %137
    %141 = vset.pattern.permute.xlu0 0
    %142 = vperm.xlu0 %141, %v132
    %v143 = vpop.permute.xlu0 %142
    %146 = vset.pattern.permute.xlu0 0
    %147 = vperm.xlu0 %146, %v133
    %v148 = vpop.permute.xlu0 %147
    %151 = vset.pattern.permute.xlu0 0
    %152 = vperm.xlu0 %151, %v134
    %v153 = vpop.permute.xlu0 %152
    %v155 = vadd.f32 %v123, %v138
    %v156 = vadd.f32 %v124, %v138
    %v157 = vadd.f32 %v125, %v143
    %v158 = vadd.f32 %v126, %v143
    %v159 = vadd.f32 %v127, %v148
    %v160 = vadd.f32 %v128, %v148
    %v161 = vadd.f32 %v129, %v153
    %v162 = vadd.f32 %v130, %v153
    %v163 = vtanh.pop %v155
    %v164 = vtanh.pop %v156
    %v165 = vtanh.pop %v157
    %v166 = vtanh.pop %v158
    %v167 = vtanh.pop %v159
    %v168 = vtanh.pop %v160
    %v169 = vtanh.pop %v161
    %v170 = vtanh.pop %v162
    %v171 = vld [vmem:[%s3] sm:$0xff]
    %v172 = vld [vmem:[%s3 + $0x8] sm:$0xff]
    %v173 = vld [vmem:[%s3 + $0x10] sm:$0xff]
    %v174 = vld [vmem:[%s3 + $0x18] sm:$0xff]
    %v175 = vpack.c.bf16 %v172, %v171
    %v176 = vpack.c.bf16 %v174, %v173
    %v177 = vpack.c.bf16 %v165, %v163
    %v178 = vpack.c.bf16 %v166, %v164
    %v179 = vpack.c.bf16 %v169, %v167
    %v180 = vpack.c.bf16 %v170, %v168
    %v181 = vld [vmem:[%s4] sm:$0xff]
    %v182 = vld [vmem:[%s4 + $0x8] sm:$0xff]
    %v183 = vld [vmem:[%s4 + $0x10] sm:$0xff]
    %v184 = vld [vmem:[%s4 + $0x18] sm:$0xff]
    %186 = vset.pattern.permute.xlu0 0
    %187 = vperm.xlu0 %186, %v181
    %v188 = vpop.permute.xlu0 %187
    %191 = vset.pattern.permute.xlu0 0
    %192 = vperm.xlu0 %191, %v182
    %v193 = vpop.permute.xlu0 %192
    %196 = vset.pattern.permute.xlu0 0
    %197 = vperm.xlu0 %196, %v183
    %v198 = vpop.permute.xlu0 %197
    %201 = vset.pattern.permute.xlu0 0
    %202 = vperm.xlu0 %201, %v184
    %v203 = vpop.permute.xlu0 %202
    %vm205 = vcmask 261120
    %v207 = vsel %vm205, %v175, 0
    %v210 = vsel %vm205, %v176, 0
    %212 = vmatprep.subr.bf16.mxu0 0
    %213 = vmatpush1.bf16.msra.mxu0 0
    %214 = vmatprep.subr.bf16.mxu0 0
    %215 = vmatpush1.bf16.msra.mxu0 0
    %216 = vmatprep.subr.bf16.mxu0 0
    %217 = vmatpush1.bf16.msra.mxu0 0
    %218 = vmatprep.subr.bf16.mxu0 0
    %219 = vmatpush1.bf16.msra.mxu0 0
    %220 = vmatprep.subr.bf16.mxu0 0
    %221 = vmatpush1.bf16.msra.mxu0 0
    %222 = vmatprep.subr.bf16.mxu0 0
    %223 = vmatpush1.bf16.msra.mxu0 0
    %224 = vmatprep.subr.bf16.mxu0 %v180
    %225 = vmatpush1.bf16.msra.mxu0 %v179
    %226 = vmatprep.subr.bf16.mxu0 %v178
    %227 = vmatpush1.bf16.msra.mxu0 %v177
    %228 = vmatprep.subr.bf16.mxu0 0
    %229 = vmatpush2.bf16.msra.mxu0 0
    %230 = vmatprep.subr.bf16.mxu0 0
    %231 = vmatpush2.bf16.msra.mxu0 0
    %232 = vmatprep.subr.bf16.mxu0 0
    %233 = vmatpush2.bf16.msra.mxu0 0
    %234 = vmatprep.subr.bf16.mxu0 0
    %235 = vmatpush2.bf16.msra.mxu0 0
    %236 = vmatprep.subr.bf16.mxu0 0
    %237 = vmatpush2.bf16.msra.mxu0 0
    %238 = vmatprep.subr.bf16.mxu0 0
    %239 = vmatpush2.bf16.msra.mxu0 0
    %240 = vmatprep.subr.bf16.mxu0 0
    %241 = vmatpush2.bf16.msra.mxu0 0
    %242 = vmatprep.subr.bf16.mxu0 0
    %243 = vmatpush2.bf16.msra.mxu0 0
    %244 = vmatprep.mubr.bf16.mxu0 0
    %245 = vmatmul.mubr.bf16.gmra.mxu0 %v207
    %v246 = vpop.f32.mrf.mxu0
    %v247 = vadd.f32 %v188, %v246
    %v248 = vpop.f32.mrf.mxu0
    %v249 = vadd.f32 %v188, %v248
    %v250 = vpop.f32.mrf.mxu0
    %v251 = vadd.f32 %v193, %v250
    %v252 = vpop.f32.mrf.mxu0
    %v253 = vadd.f32 %v193, %v252
    %254 = vmatprep.mubr.bf16.mxu0 0
    %255 = vmatmul.mubr.bf16.gmra.mxu0 %v210
    %v256 = vpop.f32.mrf.mxu0
    %v257 = vadd.f32 %v198, %v256
    %v258 = vpop.f32.mrf.mxu0
    %v259 = vadd.f32 %v198, %v258
    %v260 = vpop.f32.mrf.mxu0
    %v261 = vadd.f32 %v203, %v260
    %v262 = vpop.f32.mrf.mxu0
    %v263 = vadd.f32 %v203, %v262
    %264 = vdwg.mxu0
    %v265 = vtanh.pop %v247
    %v266 = vtanh.pop %v249
    %v267 = vtanh.pop %v251
    %v268 = vtanh.pop %v253
    %v269 = vtanh.pop %v257
    %v270 = vtanh.pop %v259
    %v271 = vtanh.pop %v261
    %v272 = vtanh.pop %v263
    %v273 = vld [vmem:[%s5] sm:$0xff]
    %v274 = vld [vmem:[%s5 + $0x8] sm:$0xff]
    %v275 = vld [vmem:[%s5 + $0x10] sm:$0xff]
    %v276 = vld [vmem:[%s5 + $0x18] sm:$0xff]
    %278 = vset.pattern.permute.xlu0 0
    %279 = vperm.xlu0 %278, %v273
    %v280 = vpop.permute.xlu0 %279
    %283 = vset.pattern.permute.xlu0 0
    %284 = vperm.xlu0 %283, %v274
    %v285 = vpop.permute.xlu0 %284
    %288 = vset.pattern.permute.xlu0 0
    %289 = vperm.xlu0 %288, %v275
    %v290 = vpop.permute.xlu0 %289
    %293 = vset.pattern.permute.xlu0 0
    %294 = vperm.xlu0 %293, %v276
    %v295 = vpop.permute.xlu0 %294
    %v297 = vmul.f32 %v280, %v265
    %v298 = vmul.f32 %v280, %v266
    %v299 = vmul.f32 %v285, %v267
    %v300 = vmul.f32 %v285, %v268
    %v301 = vmul.f32 %v290, %v269
    %v302 = vmul.f32 %v290, %v270
    %v303 = vmul.f32 %v295, %v271
    %v304 = vmul.f32 %v295, %v272
    %v305 = vadd.f32 %v297, %v299
    %v306 = vadd.f32 %v305, %v301
    %v307 = vadd.f32 %v306, %v303
    %v308 = vrot.slane %v307, 4
    %v309 = vadd.f32 %v307, %v308
    %v310 = vrot.slane %v309, 2
    %v311 = vadd.f32 %v309, %v310
    %v312 = vrot.slane %v311, 1
    %v313 = vadd.f32 %v311, %v312
    %v314 = vadd.f32 %v298, %v300
    %v315 = vadd.f32 %v314, %v302
    %v316 = vadd.f32 %v315, %v304
    %v317 = vrot.slane %v316, 4
    %v318 = vadd.f32 %v316, %v317
    %v319 = vrot.slane %v318, 2
    %v320 = vadd.f32 %v318, %v319
    %v321 = vrot.slane %v320, 1
    %v322 = vadd.f32 %v320, %v321
    %s323 = sld [smem:[#allocation2]]
    %v324 = vstv %s323
    %v325 = vadd.f32 %v313, %v324
    %v326 = vadd.f32 %v322, %v324
    %v327 = vxor.u32 %v325, 2147483648
    %v328 = vxor.u32 %v326, 2147483648
    %v329 = vmul.f32 %v327, 1.442695
    %v330 = vpow.pop %v329
    %v331 = vmul.f32 %v328, 1.442695
    %v332 = vpow.pop %v331
    %v333 = vadd.f32 %v330, 1.0
    %v334 = vadd.f32 %v332, 1.0
    %v335 = vrcp.pop %v333
    %v336 = vmul.f32 1.0, %v335
    %v337 = vrcp.pop %v334
    %v338 = vmul.f32 1.0, %v337
    %v341 = vcombine.low %v336, %v338
    %v343 = vunpack.c.l.s4 1966171168
    %v344 = vunpack.c.0.s8 %v343
    %v345 = vlaneseq
    %v346 = vshrl.u32 %v345, 7
    %v347 = vsub.s32 %v344, %v346
    %v348 = vrot.slane %v341, %v347
    %v350 = vunpack.c.l.s4 1966171168
    %v351 = vunpack.c.0.s8 %v350
    %v352 = vlaneseq
    %v353 = vshrl.u32 %v352, 7
    %v354 = vsub.s32 %v351, %v353
    %v355 = vrot.slane %v348, %v354
    %v357 = vlaneseq
    %vm358 = vcmp.ge.s32.totalorder %v357, 0
    %vm359 = vcmp.lt.s32.totalorder %v357, 256
    %vm360 = vmand %vm358, %vm359
    %361 = vst.msk [vmem:[#allocation3] sm:$0x3] %vm360, %v355
    // Predicated region
    $region30: #{_rawnet_fwd_xt.1} parent=1 // pred_check
      _
    $region31: #{_rawnet_fwd_xt.1} parent=1 // pred_check_branch
      %363 = sbr.rel (0) target = $region33
    $region32: #{_rawnet_fwd_xt.1} parent=1 // pred_region
      %s365 = ssub.s32 32, 32
      %366 = vsyncadd [#allocation4], %s365
      %s368 = sshll.u32 [#allocation3], 4
      %s369 = int_to_ptr.vmem [resolvable:$true] %s368
      %371 = dma.vmem_to_hbm [thread:$0]  %s369, 32, %s7, [#allocation4]
    $region33: #{_rawnet_fwd_xt.1} parent=1 // pred_fallthru
      _
    // Predicated region
    $region34: #{_rawnet_fwd_xt.1} parent=1 // pred_check
      _
    $region35: #{_rawnet_fwd_xt.1} parent=1 // pred_check_branch
      %373 = sbr.rel (0) target = $region37
    $region36: #{_rawnet_fwd_xt.1} parent=1 // pred_region
      %374 = dma.done [#allocation4], 32
    $region37: #{_rawnet_fwd_xt.1} parent=1 // pred_fallthru
      _
    %375 = vsyncpa [#allocation4], 1

</llo_original>
